<compile_context>
chip_gen: v6e
topology: v6e:2x2x1
jax: 0.10.0
libtpu: 0.0.40
codegen_flags: <defaults>
</compile_context>

<pallas_src>
import functools
import math

import jax
import jax.numpy as jnp
from jax import lax
from jax.experimental import pallas as pl
from jax.experimental.pallas import tpu as pltpu


def _ncr_loss_kernel(logits_ref, labels_ref, partial_ref, *, shift, is_reg,
                     eps, batch, block_rows, blocks_per_partial,
                     need_row_mask):
    c = pl.program_id(0)   # partial (core) index            -- "parallel"
    j = pl.program_id(1)   # batch-tile index in the partial -- "arbitrary"

    @pl.when(j == 0)
    def _init():
        partial_ref[...] = jnp.zeros_like(partial_ref)

    x = logits_ref[...].astype(jnp.float32)   # [TB, C]
    y = labels_ref[...].astype(jnp.float32)   # [TB, C]
    tb, num_cls = x.shape

    th = x[:, 0:1]                            # threshold logit, [TB, 1]
    rel_margin = x - th                       # col 0 is 0 here; replaced below

    col = lax.broadcasted_iota(jnp.int32, (tb, num_cls), 1)
    is_na_col = col == 0

    log_eps = float(math.log(eps))

    def ce_terms(xx, yy):
        if shift is not None and shift > 0:
            # Keep the explicit formula for exact parity with PyTorch.
            s = jax.nn.sigmoid(xx)
            xs_neg = jnp.minimum((1.0 - s) + shift, 1.0)
            los_pos = yy * jnp.log(jnp.maximum(s, eps))
            los_neg = (1.0 - yy) * jnp.log(jnp.maximum(xs_neg, eps))
        else:
            # log(sigmoid(x)) = x - softplus(x); log(1 - sigmoid(x)) = -softplus(x)
            # eps-clamp moved inside the log (log is monotone):
            # 2 EUP transcendentals / element instead of 4.
            sp = jnp.maximum(xx, 0.0) + jnp.log(1.0 + jnp.exp(-jnp.abs(xx)))
            los_pos = yy * jnp.maximum(xx - sp, log_eps)
            los_neg = (1.0 - yy) * jnp.maximum(-sp, log_eps)
        return los_pos + los_neg

    if is_reg:
        # na_margin = logits[:,0] - mean(logits[:,1:]) folded into column 0 so
        # a single full-width ce_terms pass covers both loss terms.
        mean_rest = (jnp.sum(x, axis=1, keepdims=True) - th) / float(num_cls - 1)
        margins = jnp.where(is_na_col, th - mean_rest, rel_margin)
        ce = ce_terms(margins, y)
    else:
        ce = jnp.where(is_na_col, 0.0, ce_terms(rel_margin, y))

    if need_row_mask:
        # Last batch tile may be padded past B; zero its contribution.
        row = ((c * blocks_per_partial + j) * block_rows
               + lax.broadcasted_iota(jnp.int32, (tb, num_cls), 0))
        ce = jnp.where(row < batch, ce, 0.0)

    partial_ref[...] += -jnp.sum(ce)


def ncr_loss(logits, labels, *, shift=0.0, is_reg=True, eps=1e-8,
             reduction="mean", block_rows=None, num_partials=None):
    """NCRLoss.forward(logits, labels) -> scalar."""
    B, C = logits.shape
    assert labels.shape == (B, C)

    in_itemsize = (jnp.dtype(logits.dtype).itemsize
                   + jnp.dtype(labels.dtype).itemsize)

    # Batch tile: largest multiple of 8 keeping ~8 MiB per in-flight block pair
    # (x2 for double buffering stays well under the 64 MiB v7x VMEM).
    if block_rows is None:
        budget = 8 * 1024 * 1024
        tb = max(8, budget // max(C * in_itemsize, 1))
        block_rows = B if tb >= B else (min(tb, 2048) // 8) * 8
    TB = block_rows
    if TB != B:
        assert TB % 8 == 0, "block_rows must be a multiple of 8 (or equal B)"

    n_blocks = pl.cdiv(B, TB)
    if num_partials is None:
        num_partials = 2 if (n_blocks >= 2 and n_blocks % 2 == 0) else 1
    NC = num_partials
    if NC < 1 or n_blocks % NC != 0:
        NC = 1
    nb = n_blocks // NC                       # batch tiles per partial
    need_row_mask = (n_blocks * TB) != B

    kernel = functools.partial(
        _ncr_loss_kernel, shift=shift, is_reg=is_reg, eps=eps, batch=B,
        block_rows=TB, blocks_per_partial=nb, need_row_mask=need_row_mask)

    def batch_tile_map(c, j):
        return (c * nb + j, 0)

    cost = pl.CostEstimate(
        flops=12 * B * C,
        transcendentals=2 * B * C,
        bytes_accessed=B * C * in_itemsize + NC * 8 * 128 * 4)

    partials = pl.pallas_call(
        kernel,
        out_shape=jax.ShapeDtypeStruct((NC, 8, 128), jnp.float32),
        grid=(NC, nb),
        in_specs=[
            pl.BlockSpec((TB, C), batch_tile_map),
            pl.BlockSpec((TB, C), batch_tile_map),
        ],
        out_specs=pl.BlockSpec((1, 8, 128), lambda c, j: (c, 0, 0)),
        compiler_params=pltpu.CompilerParams(
            dimension_semantics=("parallel", "arbitrary"),
            vmem_limit_bytes=48 * 1024 * 1024),
        cost_estimate=cost,
    )(logits, labels)

    loss = jnp.sum(partials[:, 0, 0])
    if reduction == "mean":
        loss = loss / float(B)
    return loss


def _ncr_loss_ref(logits, labels, *, shift=0.0, is_reg=True, eps=1e-8,
                  reduction="mean"):
    """Pure-JAX reference mirroring the PyTorch module."""
    def compute_ce(x, y):
        s = jax.nn.sigmoid(x)
        xs_neg = 1.0 - s
        if shift is not None and shift > 0:
            xs_neg = jnp.minimum(xs_neg + shift, 1.0)
        lp = y * jnp.log(jnp.maximum(s, eps))
        ln = (1.0 - y) * jnp.log(jnp.maximum(xs_neg, eps))
        return -jnp.sum(lp + ln)

    logits = logits.astype(jnp.float32)
    labels = labels.astype(jnp.float32)
    rel_margin = logits[:, 1:] - logits[:, 0:1]
    loss = compute_ce(rel_margin, labels[:, 1:])
    if is_reg:
        na_margin = logits[:, 0] - jnp.mean(logits[:, 1:], axis=-1)
        loss += compute_ce(na_margin, labels[:, 0])
    if reduction == "mean":
        loss /= labels.shape[0]
    return loss


if __name__ == "__main__":
    key = jax.random.PRNGKey(0)
    keys = jax.random.split(key, 4)

    def run_case(k, B, C, *, shift, is_reg, reduction, label_dtype,
                 block_rows=None, num_partials=None):
        k1, k2 = jax.random.split(k)
        logits = jax.random.normal(k1, (B, C), dtype=jnp.float32)
        labels = jax.random.bernoulli(k2, p=0.3, shape=(B, C)).astype(label_dtype)
        got = ncr_loss(logits, labels, shift=shift, is_reg=is_reg,
                       reduction=reduction, block_rows=block_rows,
                       num_partials=num_partials)
        got = jax.block_until_ready(got)
        want = _ncr_loss_ref(logits, labels.astype(jnp.float32), shift=shift,
                             is_reg=is_reg, reduction=reduction)
        assert jnp.allclose(got, want, rtol=3e-5, atol=3e-5), \
            (B, C, shift, is_reg, reduction, float(got), float(want))

    # 1) Toy case from the original test (single block, small C).
    run_case(keys[0], 8, 16, shift=0.0, is_reg=True, reduction="mean",
             label_dtype=jnp.float32)
    # 2) Pipelined + 2-partial ("parallel" axis) case; bf16 labels (exact {0,1}).
    run_case(keys[1], 64, 128, shift=0.0, is_reg=True, reduction="mean",
             label_dtype=jnp.bfloat16, block_rows=16, num_partials=2)
    # 3) Ragged batch (padded last tile masked) + shift>0 sigmoid path.
    run_case(keys[2], 40, 128, shift=0.05, is_reg=True, reduction="mean",
             label_dtype=jnp.float32, block_rows=16)
    # 4) isReg=False, reduction='sum'.
    run_case(keys[3], 24, 128, shift=0.0, is_reg=False, reduction="sum",
             label_dtype=jnp.float32, block_rows=8, num_partials=1)

    print("KERNEL_OK")
</pallas_src>

<mosaic_0001>
module attributes {stable_mosaic.version = 11 : i64} {
  func.func @_ncr_loss_kernel(%arg0: i32, %arg1: i32, %arg2: memref<8x16xf32, #tpu.memory_space<vmem>>, %arg3: memref<8x16xf32, #tpu.memory_space<vmem>>, %arg4: memref<1x8x128xf32, #tpu.memory_space<vmem>>) attributes {dimension_semantics = [#tpu.dimension_semantics<parallel>, #tpu.dimension_semantics<arbitrary>], iteration_bounds = array<i64: 1, 1>, scalar_prefetch = 0 : i64, scratch_operands = 0 : i64, tpu.core_type = #tpu.core_type<tc>, window_params = [{transform_indices = @transform_0, window_bounds = array<i64: 8, 16>}, {transform_indices = @transform_1, window_bounds = array<i64: 8, 16>}, {transform_indices = @transform_2, window_bounds = array<i64: 1, 8, 128>}]} {
    %c0_i32 = arith.constant 0 : i32
    %0 = arith.cmpi eq, %arg1, %c0_i32 : i32
    %1 = arith.extui %0 : i1 to i32
    %c0_i32_0 = arith.constant 0 : i32
    %2 = arith.cmpi ne, %1, %c0_i32_0 : i32
    scf.if %2 {
      %cst_21 = arith.constant 0.000000e+00 : f32
      %51 = vector.broadcast %cst_21 : f32 to vector<1x8x128xf32>
      %c0_22 = arith.constant 0 : index
      %c0_23 = arith.constant 0 : index
      %c0_24 = arith.constant 0 : index
      %52 = vector.load %arg4[%c0_22, %c0_23, %c0_24] : memref<1x8x128xf32, #tpu.memory_space<vmem>>, vector<1x8x128xf32>
      tpu.vector_store %arg4[%c0_22, %c0_23, %c0_24], %51 {strides = array<i32>} : memref<1x8x128xf32, #tpu.memory_space<vmem>>, vector<1x8x128xf32>,
    } else {
    }
    %c0 = arith.constant 0 : index
    %c0_1 = arith.constant 0 : index
    %3 = vector.load %arg2[%c0, %c0_1] : memref<8x16xf32, #tpu.memory_space<vmem>>, vector<8x16xf32>
    %c0_2 = arith.constant 0 : index
    %c0_3 = arith.constant 0 : index
    %4 = vector.load %arg3[%c0_2, %c0_3] : memref<8x16xf32, #tpu.memory_space<vmem>>, vector<8x16xf32>
    %5 = vector.extract_strided_slice %3 {offsets = [0, 0], sizes = [8, 1], strides = [1, 1]} : vector<8x16xf32> to vector<8x1xf32>
    %6 = vector.broadcast %5 : vector<8x1xf32> to vector<8x16xf32>
    %7 = arith.subf %3, %6 : vector<8x16xf32>
    %8 = tpu.iota {dimensions = array<i32: 1>} : vector<8x16xi32>
    %c0_i32_4 = arith.constant 0 : i32
    %9 = vector.broadcast %c0_i32_4 : i32 to vector<8x16xi32>
    %10 = arith.cmpi eq, %8, %9 : vector<8x16xi32>
    %cst = arith.constant dense<0.000000e+00> : vector<8xf32>
    %11 = vector.multi_reduction <add>, %3, %cst [1] : vector<8x16xf32> to vector<8xf32>
    %12 = vector.shape_cast %11 : vector<8xf32> to vector<8x1xf32>
    %13 = arith.subf %12, %5 : vector<8x1xf32>
    %cst_5 = arith.constant 1.500000e+01 : f32
    %14 = vector.broadcast %cst_5 : f32 to vector<8x1xf32>
    %15 = arith.divf %13, %14 : vector<8x1xf32>
    %16 = arith.subf %5, %15 : vector<8x1xf32>
    %17 = vector.shape_cast %16 : vector<8x1xf32> to vector<8x1xf32>
    %18 = vector.broadcast %17 : vector<8x1xf32> to vector<8x16xf32>
    %19 = arith.select %10, %18, %7 : vector<8x16xi1>, vector<8x16xf32>
    %cst_6 = arith.constant 0.000000e+00 : f32
    %20 = vector.broadcast %cst_6 : f32 to vector<8x16xf32>
    %21 = arith.maximumf %19, %20 : vector<8x16xf32>
    %22 = math.absf %19 : vector<8x16xf32>
    %cst_7 = arith.constant 0.000000e+00 : f32
    %23 = vector.broadcast %cst_7 : f32 to vector<8x16xf32>
    %24 = arith.subf %23, %22 : vector<8x16xf32>
    %25 = math.exp %24 : vector<8x16xf32>
    %cst_8 = arith.constant 1.000000e+00 : f32
    %26 = vector.broadcast %cst_8 : f32 to vector<8x16xf32>
    %27 = arith.addf %26, %25 : vector<8x16xf32>
    %28 = math.log %27 : vector<8x16xf32>
    %29 = arith.addf %21, %28 : vector<8x16xf32>
    %30 = arith.subf %19, %29 : vector<8x16xf32>
    %cst_9 = arith.constant -18.420681 : f32
    %31 = vector.broadcast %cst_9 : f32 to vector<8x16xf32>
    %32 = arith.maximumf %30, %31 : vector<8x16xf32>
    %33 = arith.mulf %4, %32 : vector<8x16xf32>
    %cst_10 = arith.constant 1.000000e+00 : f32
    %34 = vector.broadcast %cst_10 : f32 to vector<8x16xf32>
    %35 = arith.subf %34, %4 : vector<8x16xf32>
    %cst_11 = arith.constant 0.000000e+00 : f32
    %36 = vector.broadcast %cst_11 : f32 to vector<8x16xf32>
    %37 = arith.subf %36, %29 : vector<8x16xf32>
    %cst_12 = arith.constant -18.420681 : f32
    %38 = vector.broadcast %cst_12 : f32 to vector<8x16xf32>
    %39 = arith.maximumf %37, %38 : vector<8x16xf32>
    %40 = arith.mulf %35, %39 : vector<8x16xf32>
    %41 = arith.addf %33, %40 : vector<8x16xf32>
    %c0_13 = arith.constant 0 : index
    %c0_14 = arith.constant 0 : index
    %c0_15 = arith.constant 0 : index
    %42 = vector.load %arg4[%c0_13, %c0_14, %c0_15] : memref<1x8x128xf32, #tpu.memory_space<vmem>>, vector<1x8x128xf32>
    %43 = vector.shape_cast %41 : vector<8x16xf32> to vector<1x8x16xf32>
    %cst_16 = arith.constant dense<0.000000e+00> : vector<1xf32>
    %44 = vector.multi_reduction <add>, %43, %cst_16 [1, 2] : vector<1x8x16xf32> to vector<1xf32>
    %45 = vector.shape_cast %44 : vector<1xf32> to vector<1x1x1xf32>
    %46 = vector.extract %45[0, 0, 0] : f32 from vector<1x1x1xf32>
    %cst_17 = arith.constant 0.000000e+00 : f32
    %47 = arith.subf %cst_17, %46 : f32
    %48 = vector.broadcast %47 : f32 to vector<1x8x128xf32>
    %49 = arith.addf %42, %48 : vector<1x8x128xf32>
    %c0_18 = arith.constant 0 : index
    %c0_19 = arith.constant 0 : index
    %c0_20 = arith.constant 0 : index
    %50 = vector.load %arg4[%c0_18, %c0_19, %c0_20] : memref<1x8x128xf32, #tpu.memory_space<vmem>>, vector<1x8x128xf32>
    tpu.vector_store %arg4[%c0_18, %c0_19, %c0_20], %49 {strides = array<i32>} : memref<1x8x128xf32, #tpu.memory_space<vmem>>, vector<1x8x128xf32>,
    return
  }
  func.func @transform_0(%arg0: i32, %arg1: i32) -> (i32, i32) {
    %c1_i32 = arith.constant 1 : i32
    %0 = arith.muli %arg0, %c1_i32 : i32
    %1 = arith.addi %0, %arg1 : i32
    %c0_i32 = arith.constant 0 : i32
    %c0_i32_0 = arith.constant 0 : i32
    return %1, %c0_i32 : i32, i32
  }
  func.func @transform_1(%arg0: i32, %arg1: i32) -> (i32, i32) {
    %c1_i32 = arith.constant 1 : i32
    %0 = arith.muli %arg0, %c1_i32 : i32
    %1 = arith.addi %0, %arg1 : i32
    %c0_i32 = arith.constant 0 : i32
    %c0_i32_0 = arith.constant 0 : i32
    return %1, %c0_i32 : i32, i32
  }
  func.func @transform_2(%arg0: i32, %arg1: i32) -> (i32, i32, i32) {
    %c0_i32 = arith.constant 0 : i32
    %c0_i32_0 = arith.constant 0 : i32
    %c0_i32_1 = arith.constant 0 : i32
    return %arg0, %c0_i32, %c0_i32_0 : i32, i32, i32
  }
}

</mosaic_0001>

<llo_original>
// kernel: tpu_custom_call.1
$region0: #{tpu_custom_call.1}
  #allocation0 [shape = 'u32[]', space=smem, size = 0x4, offset = 0x4, fixed_abs, tag = 'smem constant byte address 0x4 - core index']
  #allocation1 [shape = 'u32[144,128]{1,0:T(1,128)}', space=vmem, size = 0x12000, scoped, tag = 'internal scratch']
  %s0 = inlined_call_operand.hbm [shape: f32[8,16], index: 0, kind: input, shape index: {}]
  %s1 = inlined_call_operand.hbm [shape: f32[8,16], index: 1, kind: input, shape index: {}]
  %s2 = inlined_call_operand.hbm [shape: f32[1,8,128], index: 2, kind: output, shape index: {}]
  %s3 = sld [smem:[#allocation0]]
  $region30: #{tpu_custom_call.1} parent=0
    _
  %s5 = ssub.s32 1, %s3
  %s6 = scalar_select 0, %s5, %s3
  $region1: #{tpu_custom_call.1} parent=0
    #allocation2 [shape = 'u8[4096]{0}', space=vmem, size = 0x1000, scoped, tag = 'input window, operand 0, single buffered']
    #allocation3 [shape = 's32[1]{0}', space=sflag, size = 0x4, scoped, tag = 'scoped memory for tpu_custom_call.1']
    #allocation4 [shape = 's32[1]{0}', space=sflag, size = 0x4, scoped, tag = 'scoped memory for tpu_custom_call.1']
    #allocation5 [shape = 'u8[4096]{0}', space=vmem, size = 0x1000, scoped, tag = 'input window, operand 1, single buffered']
    #allocation6 [shape = 's32[1]{0}', space=sflag, size = 0x4, scoped, tag = 'scoped memory for tpu_custom_call.1']
    #allocation7 [shape = 'u8[4096]{0}', space=vmem, size = 0x1000, scoped, tag = 'output window, operand 0, single buffered']
    %7 = vsyncpa [#allocation3], 0
    %8 = vsyncpa [#allocation6], 0
    %9 = vsyncpa [#allocation4], 0
    // Predicated region
    $region2: #{tpu_custom_call.1} parent=1 // pred_check
      _
    $region3: #{tpu_custom_call.1} parent=1 // pred_check_branch
      %11 = sbr.rel (0) target = $region5
    $region4: #{tpu_custom_call.1} parent=1 // pred_region
      %s12 = sadd.s32 0, 0
      %s14 = ssub.s32 128, 128
      %15 = vsyncadd [#allocation3], %s14
      %s16 = smul.addr %s12, 128
      %s17 = scalar_lea.hbm %s0, %s16
      %s19 = sshll.u32 [#allocation2], 4
      %s20 = int_to_ptr.vmem [resolvable:$true] %s19
      %22 = dma.hbm_to_vmem [thread:$0]  %s17, 128, %s20, [#allocation3]
    $region5: #{tpu_custom_call.1} parent=1 // pred_fallthru
      _
    // Predicated region
    $region6: #{tpu_custom_call.1} parent=1 // pred_check
      _
    $region7: #{tpu_custom_call.1} parent=1 // pred_check_branch
      %24 = sbr.rel (0) target = $region9
    $region8: #{tpu_custom_call.1} parent=1 // pred_region
      %s25 = sadd.s32 0, 0
      %s27 = ssub.s32 128, 128
      %28 = vsyncadd [#allocation6], %s27
      %s29 = smul.addr %s25, 128
      %s30 = scalar_lea.hbm %s1, %s29
      %s32 = sshll.u32 [#allocation5], 4
      %s33 = int_to_ptr.vmem [resolvable:$true] %s32
      %35 = dma.hbm_to_vmem [thread:$0]  %s30, 128, %s33, [#allocation6]
    $region9: #{tpu_custom_call.1} parent=1 // pred_fallthru
      _
    // Predicated region
    $region10: #{tpu_custom_call.1} parent=1 // pred_check
      _
    $region11: #{tpu_custom_call.1} parent=1 // pred_check_branch
      %37 = sbr.rel (0) target = $region13
    $region12: #{tpu_custom_call.1} parent=1 // pred_region
      %38 = dma.done [#allocation3], 128
    $region13: #{tpu_custom_call.1} parent=1 // pred_fallthru
      _
    // Predicated region
    $region14: #{tpu_custom_call.1} parent=1 // pred_check
      _
    $region15: #{tpu_custom_call.1} parent=1 // pred_check_branch
      %40 = sbr.rel (0) target = $region17
    $region16: #{tpu_custom_call.1} parent=1 // pred_region
      %41 = dma.done [#allocation6], 128
    $region17: #{tpu_custom_call.1} parent=1 // pred_fallthru
      _
    %s42 = sadd.s32 0, 0
    %s43 = sadd.s32 0, 0
    %p44 = scmp.eq.s32.totalorder 0, 0
    // Predicated region
    $region18: #{tpu_custom_call.1} parent=1 // pred_check
      %p45 = pneg %p44
    $region19: #{tpu_custom_call.1} parent=1 // pred_check_branch
      %47 = sbr.rel (%p45) target = $region21
    $region20: #{tpu_custom_call.1} parent=1 // pred_region
      %48 = vst [vmem:[#allocation7] sm:$0xff] 0.0
    $region21: #{tpu_custom_call.1} parent=1 // pred_fallthru
      _
    %v49 = vld [vmem:[#allocation2] sm:$0xff]
    %v50 = vld [vmem:[#allocation5] sm:$0xff]
    %52 = vset.pattern.permute.xlu0 0
    %53 = vperm.xlu0 %52, %v49
    %v54 = vpop.permute.xlu0 %53
    %v56 = vsub.f32 %v49, %v54
    %v57 = vlaneseq
    %v58 = vand.u32 %v57, 127
    %vm59 = vcmp.eq.s32.totalorder %v58, 0
    %vm60 = vcmask 130048
    %v61 = vsel %vm60, %v49, 0.0
    %62 = vadd.xlane.f32.xlu0 %v61
    %v63 = vpop.xlane.xlu0 %62
    %v64 = vsub.f32 %v63, %v49
    %v65 = vrcp.pop 15.0
    %v66 = vmul.f32 %v64, %v65
    %v67 = vsub.f32 %v49, %v66
    %69 = vset.pattern.permute.xlu0 0
    %70 = vperm.xlu0 %69, %v67
    %v71 = vpop.permute.xlu0 %70
    %v73 = vsel %vm59, %v71, %v56
    %v74 = vmax.f32 %v73, 0.0
    %v75 = vand.u32 2147483647, %v73
    %v76 = vsub.f32 0.0, %v75
    %v77 = vmul.f32 %v76, 1.442695
    %v78 = vpow.pop %v77
    %v79 = vadd.f32 %v78, 1.0
    %v80 = vlog2.pop %v79
    %v81 = vmul.f32 %v80, 0.6931472
    %v82 = vadd.f32 %v74, %v81
    %v83 = vsub.f32 %v73, %v82
    %v84 = vmax.f32 %v83, -18.420681
    %v85 = vmul.f32 %v50, %v84
    %v86 = vsub.f32 1.0, %v50
    %v87 = vsub.f32 0.0, %v82
    %v88 = vmax.f32 %v87, -18.420681
    %v89 = vmul.f32 %v86, %v88
    %v90 = vadd.f32 %v85, %v89
    %v91 = vld [vmem:[#allocation7] sm:$0xff]
    %v92 = vsel %vm60, %v90, 0.0
    %93 = vadd.xlane.f32.xlu0 %v92
    %v94 = vpop.xlane.xlu0 %93
    %v95 = vrot.slane %v94, 4
    %v96 = vadd.f32 %v94, %v95
    %v97 = vrot.slane %v96, 2
    %v98 = vadd.f32 %v96, %v97
    %v99 = vrot.slane %v98, 1
    %v100 = vadd.f32 %v98, %v99
    %s101 = vtos %v100
    %s102 = ssub.f32 0.0, %s101
    %v103 = vstv %s102
    %v104 = vadd.f32 %v91, %v103
    %105 = vst [vmem:[#allocation7] sm:$0xff] %v104
    // Predicated region
    $region22: #{tpu_custom_call.1} parent=1 // pred_check
      _
    $region23: #{tpu_custom_call.1} parent=1 // pred_check_branch
      %107 = sbr.rel (0) target = $region25
    $region24: #{tpu_custom_call.1} parent=1 // pred_region
      %s109 = ssub.s32 128, 128
      %110 = vsyncadd [#allocation4], %s109
      %s112 = sshll.u32 [#allocation7], 4
      %s113 = int_to_ptr.vmem [resolvable:$true] %s112
      %115 = dma.vmem_to_hbm [thread:$0]  %s113, 128, %s2, [#allocation4]
    $region25: #{tpu_custom_call.1} parent=1 // pred_fallthru
      _
    // Predicated region
    $region26: #{tpu_custom_call.1} parent=1 // pred_check
      _
    $region27: #{tpu_custom_call.1} parent=1 // pred_check_branch
      %117 = sbr.rel (0) target = $region29
    $region28: #{tpu_custom_call.1} parent=1 // pred_region
      %118 = dma.done [#allocation4], 128
    $region29: #{tpu_custom_call.1} parent=1 // pred_fallthru
      _
    %119 = vsyncpa [#allocation3], 1
    %120 = vsyncpa [#allocation6], 1
    %121 = vsyncpa [#allocation4], 1

</llo_original>
